<compile_context>
chip_gen: v7x
topology: tpu7x:2x2x1
jax: 0.10.0
libtpu: 0.0.40
codegen_flags: <defaults>
</compile_context>

<pallas_src>
import jax
import jax.numpy as jnp
from jax.experimental import pallas as pl
from jax.experimental.pallas import tpu as pltpu

N_TARGET_NODES = 32  # number of graph nodes == feature dim of layer 1


# ----------------------------------------------------------------------------
# Pallas kernel: one grid step == half of the batch (gph graphs, M = gph*N
# nodes, block-diagonal adjacency), everything in transposed (lane-major)
# layout so the output is a single lane-dense [1, M] row.
# ----------------------------------------------------------------------------
def discriminator_kernel(at_ref, xt_ref, w1t_ref, b1c_ref, w2c_ref, b2_ref, o_ref):
    # Blocks:
    #   at   (1, M, M)  bf16   block-diagonal A_hat^T for this half of the batch
    #   xt   (1, F, M)  bf16   X^T, nodes on the lane axis
    #   w1t  (F, F)     bf16   W1^T (shared)
    #   b1c  (F, 1)     f32    b1 as a column (shared)
    #   w2c  (F, 1)     f32    w2 as a column (shared)
    #   b2   (1, 1)     f32    scalar in SMEM
    #   out  (1, 1, M)  f32    lane-dense row of sigmoided logits
    at = at_ref[0]                                   # [M, M] bf16
    xt = xt_ref[0]                                   # [F, M] bf16

    # ---- GCNConv 1 (transposed):  H^T = sigmoid(W1^T X^T A^T + b1) ----------
    xw_t = jnp.dot(w1t_ref[...], xt, preferred_element_type=jnp.float32)     # [F, M]
    pre = jnp.dot(xw_t.astype(jnp.bfloat16), at,
                  preferred_element_type=jnp.float32)                        # [F, M]
    h_t = jax.nn.sigmoid(pre + b1c_ref[...])         # f32 elementwise (v5e-safe)

    # ---- Dropout -------------------------------------------------------------
    # TODO(synk): F.dropout(training=True) would need pltpu.prng_seed /
    # prng_random_bits + 1/(1-p) scaling; implemented as identity (eval mode).

    # ---- GCNConv 2 (transposed):  logits^T = w2^T (H^T A^T) + b2 -------------
    g_t = jnp.dot(h_t.astype(jnp.bfloat16), at,
                  preferred_element_type=jnp.float32)                        # [F, M]
    # VPU multiply + sublane reduce -> result is already a lane-dense [1, M] row.
    logits = jnp.sum(g_t * w2c_ref[...], axis=0, keepdims=True) + b2_ref[0, 0]

    o_ref[...] = jax.nn.sigmoid(logits).reshape(o_ref.shape)   # unmasked 128-lane store


# ----------------------------------------------------------------------------
# Wrapper: builds normalized adjacency, block-diag stacks per grid step,
# pre-casts MXU operands to bf16, calls the kernel, restores (B, N, 1) layout.
# ----------------------------------------------------------------------------
def _block_diag(a, num_steps, gph):
    """a: [B, N, N] -> [num_steps, gph*N, gph*N] block-diagonal per step."""
    _, n, _ = a.shape
    a = a.reshape(num_steps, gph, n, n)
    eye = jnp.eye(gph, dtype=a.dtype)
    bd = jnp.einsum("gimn,ij->gimjn", a, eye)
    return bd.reshape(num_steps, gph * n, gph * n)


def build_gcn_adjacency(edge_index, edge_weight, num_nodes):
    """Dense A_hat (out = A_hat @ X).  No XLA scatter: one-hot matmuls only.

    Matches PyG gcn_norm + add_remaining_self_loops: existing self-loops keep
    their weight, missing self-loops get weight 1.
    """
    row, col = edge_index[0], edge_index[1]            # source, target
    w = edge_weight
    nodes = jnp.arange(num_nodes, dtype=edge_index.dtype)
    onehot_row = (row[:, None] == nodes[None, :]).astype(w.dtype)   # [E, N]
    onehot_col = (col[:, None] == nodes[None, :]).astype(w.dtype)   # [E, N]

    is_self = row == col
    w_off = jnp.where(is_self, jnp.zeros_like(w), w)    # non-self-loop weights
    # A_full[t, s] = sum of weights of edges s -> t
    a_off = jnp.einsum("et,es->ts", onehot_col * w_off[:, None], onehot_row)

    # Self-loop weights: keep existing self-loop weight, else fill with 1.
    w_self = jnp.where(is_self, w, jnp.zeros_like(w))
    loop_sum = w_self @ onehot_row                       # [N]
    has_self = (is_self.astype(w.dtype) @ onehot_row) > 0
    loop_w = jnp.where(has_self, loop_sum, jnp.ones_like(loop_sum))
    a_full = a_off + loop_w[:, None] * jnp.eye(num_nodes, dtype=w.dtype)

    deg = a_full.sum(axis=1)                             # weighted in-degree
    dinv = jnp.where(deg > 0, jax.lax.rsqrt(deg), 0.0)
    return dinv[:, None] * a_full * dinv[None, :]        # A_hat


def discriminator_forward(x, edge_index, edge_attr, w1, b1, w2, b2):
    """x: [B,N,F], edge_index: [B,2,E] int32, edge_attr: [B,E]  ->  [B,N,1]."""
    bsz, n, f = x.shape
    # Two "parallel" grid steps so both TensorCores get work on v7x; on
    # v5e/v6e the extra step is ~0.35 us.  A 1-step grid is used for tiny B.
    num_steps = 2 if (bsz % 2 == 0 and bsz >= 2) else 1
    gph = bsz // num_steps
    m = gph * n

    a_norm = jax.vmap(lambda ei, ew: build_gcn_adjacency(ei, ew, n))(
        edge_index, edge_attr)                                          # [B, N, N] f32

    # Transposed, block-diag-stacked, bf16 MXU operands (pre-cast in wrapper).
    at_bd = _block_diag(jnp.swapaxes(a_norm, 1, 2), num_steps, gph)     # [S, M, M]
    at_bd = at_bd.astype(jnp.bfloat16)
    xt = jnp.swapaxes(x.reshape(num_steps, m, f), 1, 2).astype(jnp.bfloat16)  # [S, F, M]
    w1t = w1.T.astype(jnp.bfloat16)                                     # [F, F]
    b1c = b1.reshape(f, 1).astype(jnp.float32)                          # [F, 1]
    w2c = w2.reshape(f, 1).astype(jnp.float32)                          # [F, 1]
    b2s = b2.reshape(1, 1).astype(jnp.float32)                          # [1, 1] (SMEM)

    flops = num_steps * (2 * f * f * m + 2 * (2 * f * m * m) + 2 * f * m)
    transcendentals = num_steps * (f * m + m)                           # sigmoids
    bytes_accessed = (2 * (at_bd.size + xt.size + w1t.size)
                      + 4 * (b1c.size + w2c.size + b2s.size + num_steps * m))

    out = pl.pallas_call(
        discriminator_kernel,
        out_shape=jax.ShapeDtypeStruct((num_steps, 1, m), jnp.float32),
        grid=(num_steps,),
        in_specs=[
            pl.BlockSpec((1, m, m), lambda g: (g, 0, 0)),        # A_hat^T (half batch)
            pl.BlockSpec((1, f, m), lambda g: (g, 0, 0)),        # X^T     (half batch)
            pl.BlockSpec((f, f), lambda g: (0, 0)),              # W1^T    (shared)
            pl.BlockSpec((f, 1), lambda g: (0, 0)),              # b1 col  (shared)
            pl.BlockSpec((f, 1), lambda g: (0, 0)),              # w2 col  (shared)
            pl.BlockSpec(memory_space=pltpu.MemorySpace.SMEM),   # b2 scalar
        ],
        out_specs=pl.BlockSpec((1, 1, m), lambda g: (g, 0, 0)),
        compiler_params=pltpu.CompilerParams(
            dimension_semantics=("parallel",)),                  # shard steps across TCs
        cost_estimate=pl.CostEstimate(
            flops=flops,
            transcendentals=transcendentals,
            bytes_accessed=bytes_accessed),
    )(at_bd, xt, w1t, b1c, w2c, b2s)

    # Lane-major [S, 1, M] -> module's per-graph (N, 1) layout.
    return out.reshape(bsz, n, 1)


if __name__ == "__main__":
    key = jax.random.PRNGKey(0)
    k_x, k_e, k_w, k_w1, k_w2 = jax.random.split(key, 5)

    n = N_TARGET_NODES
    batch = 8          # number of graphs / discriminator evaluations per call
    n_edges = 64

    # Node features: [B, n, N_TARGET_NODES]
    x = jax.random.normal(k_x, (batch, n, N_TARGET_NODES), dtype=jnp.float32)

    # Random edge lists + positive edge weights (edge_attr) per graph
    edge_index = jax.random.randint(k_e, (batch, 2, n_edges), 0, n, dtype=jnp.int32)
    edge_attr = jnp.abs(jax.random.normal(k_w, (batch, n_edges), dtype=jnp.float32)) + 0.1

    # Deterministic parameter init (GCNConv: weight [in, out], bias [out])
    w1 = jax.random.normal(k_w1, (N_TARGET_NODES, N_TARGET_NODES),
                           dtype=jnp.float32) * 0.1
    b1 = jnp.zeros((N_TARGET_NODES,), dtype=jnp.float32)
    w2 = jax.random.normal(k_w2, (N_TARGET_NODES, 1), dtype=jnp.float32) * 0.1
    b2 = jnp.zeros((1,), dtype=jnp.float32)

    fwd = jax.jit(discriminator_forward)
    out = jax.block_until_ready(fwd(x, edge_index, edge_attr, w1, b1, w2, b2))

    # Pure-JAX reference (f32) for a sanity check (kernel uses bf16 MXU inputs).
    a_norm = jax.vmap(lambda ei, ew: build_gcn_adjacency(ei, ew, n))(edge_index, edge_attr)

    def ref_one(a, xg):
        h = jax.nn.sigmoid(a @ xg @ w1 + b1.reshape(1, -1))
        return jax.nn.sigmoid(a @ h @ w2 + b2.reshape(1, 1))

    ref = jax.vmap(ref_one)(a_norm, x)

    assert out.shape == (batch, n, 1)
    assert bool(jnp.all(jnp.isfinite(out)))
    assert float(jnp.max(jnp.abs(out - ref))) < 5e-2
    print("KERNEL_OK")
</pallas_src>

<mosaic_0001>
module attributes {stable_mosaic.version = 11 : i64} {
  func.func @discriminator_kernel(%arg0: i32, %arg1: memref<1x128x128xbf16, #tpu.memory_space<vmem>>, %arg2: memref<1x32x128xbf16, #tpu.memory_space<vmem>>, %arg3: memref<32x32xbf16, #tpu.memory_space<vmem>>, %arg4: memref<32x1xf32, #tpu.memory_space<vmem>>, %arg5: memref<32x1xf32, #tpu.memory_space<vmem>>, %arg6: memref<1x1xf32, #tpu.memory_space<smem>>, %arg7: memref<1x1x128xf32, #tpu.memory_space<vmem>>) attributes {dimension_semantics = [#tpu.dimension_semantics<parallel>], iteration_bounds = array<i64: 2>, scalar_prefetch = 0 : i64, scratch_operands = 0 : i64, tpu.core_type = #tpu.core_type<tc>, window_params = [{transform_indices = @transform_0, window_bounds = array<i64: 1, 128, 128>}, {transform_indices = @transform_1, window_bounds = array<i64: 1, 32, 128>}, {pipeline_mode = #tpu.pipeline_mode<synchronous>, transform_indices = @transform_2, window_bounds = array<i64: 32, 32>}, {pipeline_mode = #tpu.pipeline_mode<synchronous>, transform_indices = @transform_3, window_bounds = array<i64: 32, 1>}, {pipeline_mode = #tpu.pipeline_mode<synchronous>, transform_indices = @transform_4, window_bounds = array<i64: 32, 1>}, {transform_indices = @transform_5, window_bounds = array<i64: 1, 1>}, {transform_indices = @transform_6, window_bounds = array<i64: 1, 1, 128>}]} {
    %c0 = arith.constant 0 : index
    %c0_0 = arith.constant 0 : index
    %c0_1 = arith.constant 0 : index
    %0 = vector.load %arg1[%c0, %c0_0, %c0_1] : memref<1x128x128xbf16, #tpu.memory_space<vmem>>, vector<1x128x128xbf16>
    %1 = vector.shape_cast %0 : vector<1x128x128xbf16> to vector<128x128xbf16>
    %c0_2 = arith.constant 0 : index
    %c0_3 = arith.constant 0 : index
    %c0_4 = arith.constant 0 : index
    %2 = vector.load %arg2[%c0_2, %c0_3, %c0_4] : memref<1x32x128xbf16, #tpu.memory_space<vmem>>, vector<1x32x128xbf16>
    %3 = vector.shape_cast %2 : vector<1x32x128xbf16> to vector<32x128xbf16>
    %c0_5 = arith.constant 0 : index
    %c0_6 = arith.constant 0 : index
    %4 = vector.load %arg3[%c0_5, %c0_6] : memref<32x32xbf16, #tpu.memory_space<vmem>>, vector<32x32xbf16>
    %cst = arith.constant dense<0.000000e+00> : vector<32x128xf32>
    %5 = tpu.matmul %4, %3, %cst {dimension_numbers = #tpu.dot_dimension_numbers<[1], [0], [0], [1], [0, 0, 1, 1], [], []>} : vector<32x32xbf16>, vector<32x128xbf16>, vector<32x128xf32> -> vector<32x128xf32>
    %6 = arith.truncf %5 : vector<32x128xf32> to vector<32x128xbf16>
    %cst_7 = arith.constant dense<0.000000e+00> : vector<32x128xf32>
    %7 = tpu.matmul %6, %1, %cst_7 {dimension_numbers = #tpu.dot_dimension_numbers<[1], [0], [0], [1], [0, 0, 1, 1], [], []>} : vector<32x128xbf16>, vector<128x128xbf16>, vector<32x128xf32> -> vector<32x128xf32>
    %c0_8 = arith.constant 0 : index
    %c0_9 = arith.constant 0 : index
    %8 = vector.load %arg4[%c0_8, %c0_9] : memref<32x1xf32, #tpu.memory_space<vmem>>, vector<32x1xf32>
    %9 = vector.broadcast %8 : vector<32x1xf32> to vector<32x128xf32>
    %10 = arith.addf %7, %9 : vector<32x128xf32>
    %11 = arith.negf %10 : vector<32x128xf32>
    %12 = math.exp %11 : vector<32x128xf32>
    %cst_10 = arith.constant 1.000000e+00 : f32
    %13 = vector.broadcast %cst_10 : f32 to vector<32x128xf32>
    %14 = arith.addf %13, %12 : vector<32x128xf32>
    %15 = arith.divf %13, %14 : vector<32x128xf32>
    %16 = arith.truncf %15 : vector<32x128xf32> to vector<32x128xbf16>
    %cst_11 = arith.constant dense<0.000000e+00> : vector<32x128xf32>
    %17 = tpu.matmul %16, %1, %cst_11 {dimension_numbers = #tpu.dot_dimension_numbers<[1], [0], [0], [1], [0, 0, 1, 1], [], []>} : vector<32x128xbf16>, vector<128x128xbf16>, vector<32x128xf32> -> vector<32x128xf32>
    %c0_12 = arith.constant 0 : index
    %c0_13 = arith.constant 0 : index
    %18 = vector.load %arg5[%c0_12, %c0_13] : memref<32x1xf32, #tpu.memory_space<vmem>>, vector<32x1xf32>
    %19 = vector.broadcast %18 : vector<32x1xf32> to vector<32x128xf32>
    %20 = arith.mulf %17, %19 : vector<32x128xf32>
    %cst_14 = arith.constant dense<0.000000e+00> : vector<128xf32>
    %21 = vector.multi_reduction <add>, %20, %cst_14 [0] : vector<32x128xf32> to vector<128xf32>
    %22 = vector.shape_cast %21 : vector<128xf32> to vector<1x128xf32>
    %c0_15 = arith.constant 0 : index
    %c0_16 = arith.constant 0 : index
    %23 = memref.load %arg6[%c0_15, %c0_16] : memref<1x1xf32, #tpu.memory_space<smem>>
    %24 = vector.broadcast %23 : f32 to vector<1x128xf32>
    %25 = arith.addf %22, %24 : vector<1x128xf32>
    %26 = arith.negf %25 : vector<1x128xf32>
    %27 = math.exp %26 : vector<1x128xf32>
    %cst_17 = arith.constant 1.000000e+00 : f32
    %28 = vector.broadcast %cst_17 : f32 to vector<1x128xf32>
    %29 = arith.addf %28, %27 : vector<1x128xf32>
    %30 = arith.divf %28, %29 : vector<1x128xf32>
    %31 = vector.shape_cast %30 : vector<1x128xf32> to vector<1x1x128xf32>
    %c0_18 = arith.constant 0 : index
    %c0_19 = arith.constant 0 : index
    %c0_20 = arith.constant 0 : index
    %32 = vector.load %arg7[%c0_18, %c0_19, %c0_20] : memref<1x1x128xf32, #tpu.memory_space<vmem>>, vector<1x1x128xf32>
    tpu.vector_store %arg7[%c0_18, %c0_19, %c0_20], %31 {strides = array<i32>} : memref<1x1x128xf32, #tpu.memory_space<vmem>>, vector<1x1x128xf32>,
    return
  }
  func.func @transform_0(%arg0: i32) -> (i32, i32, i32) {
    %c0_i32 = arith.constant 0 : i32
    %c0_i32_0 = arith.constant 0 : i32
    %c0_i32_1 = arith.constant 0 : i32
    return %arg0, %c0_i32, %c0_i32_0 : i32, i32, i32
  }
  func.func @transform_1(%arg0: i32) -> (i32, i32, i32) {
    %c0_i32 = arith.constant 0 : i32
    %c0_i32_0 = arith.constant 0 : i32
    %c0_i32_1 = arith.constant 0 : i32
    return %arg0, %c0_i32, %c0_i32_0 : i32, i32, i32
  }
  func.func @transform_2(%arg0: i32) -> (i32, i32) {
    %c0_i32 = arith.constant 0 : i32
    %c0_i32_0 = arith.constant 0 : i32
    %c0_i32_1 = arith.constant 0 : i32
    return %c0_i32, %c0_i32_0 : i32, i32
  }
  func.func @transform_3(%arg0: i32) -> (i32, i32) {
    %c0_i32 = arith.constant 0 : i32
    %c0_i32_0 = arith.constant 0 : i32
    %c0_i32_1 = arith.constant 0 : i32
    return %c0_i32, %c0_i32_0 : i32, i32
  }
  func.func @transform_4(%arg0: i32) -> (i32, i32) {
    %c0_i32 = arith.constant 0 : i32
    %c0_i32_0 = arith.constant 0 : i32
    %c0_i32_1 = arith.constant 0 : i32
    return %c0_i32, %c0_i32_0 : i32, i32
  }
  func.func @transform_5(%arg0: i32) -> (i32, i32) {
    %c0_i32 = arith.constant 0 : i32
    %c0_i32_0 = arith.constant 0 : i32
    %c0_i32_1 = arith.constant 0 : i32
    return %c0_i32, %c0_i32_0 : i32, i32
  }
  func.func @transform_6(%arg0: i32) -> (i32, i32, i32) {
    %c0_i32 = arith.constant 0 : i32
    %c0_i32_0 = arith.constant 0 : i32
    %c0_i32_1 = arith.constant 0 : i32
    return %arg0, %c0_i32, %c0_i32_0 : i32, i32, i32
  }
}

</mosaic_0001>

<llo_original>
// kernel: discriminator_forward.1
$region0: #{discriminator_forward.1}
  #allocation0 [shape = 'u32[]', space=smem, size = 0x4, offset = 0x4, fixed_abs, tag = 'smem constant byte address 0x4 - core index']
  #allocation1 [shape = 'u32[144,128]{1,0:T(1,128)}', space=vmem, size = 0x12000, scoped, tag = 'internal scratch']
  #allocation2 [shape = 'f32[1,1]{1,0:T(1,128)S(6)}', space=smem, size = 0x200, scoped, tag = 'scoped memory for discriminator_forward.1']
  %s0 = inlined_call_operand.vmem [shape: bf16[2,128,128], index: 0, kind: input, shape index: {}]
  %s1 = inlined_call_operand.vmem [shape: bf16[2,32,128], index: 1, kind: input, shape index: {}]
  %s2 = inlined_call_operand.vmem [shape: bf16[32,32], index: 2, kind: input, shape index: {}]
  %s3 = inlined_call_operand.vmem [shape: f32[32,1], index: 3, kind: input, shape index: {}]
  %s4 = inlined_call_operand.vmem [shape: f32[32,1], index: 4, kind: input, shape index: {}]
  %s5 = inlined_call_operand.<no memory space> [shape: f32[1,1], index: 5, kind: input, shape index: {}]
  %s6 = inlined_call_operand.vmem [shape: f32[2,1,128], index: 6, kind: output, shape index: {}]
  %s7 = sld [smem:[#allocation0]]
  $region57: #{discriminator_forward.1} parent=0
    _
  %s9 = ssub.s32 1, %s7
  %s10 = scalar_select 0, %s9, %s7
  %11 = sst [smem:[#allocation2]] %s5
  loop: start=0, step=1, limit=4
  $region2: #{discriminator_forward.1} parent=0 // loop_pre_header
    _
  $region3: #{discriminator_forward.1} parent=0 // loop_header
    %s13 = sphi 0, %s17
    %p14 = scmp.ge.s32.totalorder %s13, 4
    %s23 = sphi 0, %s25
    %s26 = sphi 0, %s23
    %s27 = sphi 0, %s26
    %s43 = sphi 0, %s27
    %s49 = sphi 0, %s51
    %s52 = sphi 0, %s49
    %s53 = sphi 0, %s52
    %s69 = sphi 0, %s53
    %s73 = sphi 0, %s73
    %s75 = sphi 0, %s73
    %s76 = sphi 0, %s75
    %s90 = sphi 0, %s76
    %s94 = sphi 0, %s94
    %s96 = sphi 0, %s94
    %s97 = sphi 0, %s96
    %s111 = sphi 0, %s97
    %s115 = sphi 0, %s115
    %s117 = sphi 0, %s115
    %s118 = sphi 0, %s117
    %s132 = sphi 0, %s118
    %s136 = sphi 0, %s136
    %s138 = sphi 0, %s136
    %s139 = sphi 0, %s138
    %s153 = sphi 0, %s139
    %s159 = sphi 0, %s161
    %s162 = sphi 0, %s159
    %s163 = sphi 0, %s162
    %s179 = sphi 0, %s163
  $region4: #{discriminator_forward.1} parent=0 // loop_header_branch
    %16 = sbr.rel (%p14) target = $region8
  $region5: #{discriminator_forward.1} parent=0 // loop_body
    %s18 = ssub.s32 %s13, 1
    %s19 = ssub.s32 %s13, 2
    %s20 = sadd.s32 %s13, 1
    %s21 = ssub.s32 %s13, %s20
    %p22 = scmp.eq.s32.totalorder %s21, 0
    %s24 = sadd.s32 %s23, 1
    %s25 = scalar_select %p22, %s23, %s24
    %p28 = pneg %p22
    %p29 = scmp.eq.s32.totalorder %s13, 1
    %p30 = por %p28, %p29
    %p31 = scmp.ne.s32.totalorder %s23, %s26
    %p32 = scmp.eq.s32.totalorder %s13, 0
    %p33 = por %p31, %p32
    %p34 = scmp.ne.s32.totalorder %s23, %s26
    %p35 = scmp.eq.s32.totalorder %s18, 1
    %p36 = por %p34, %p35
    %p37 = scmp.ne.s32.totalorder %s26, %s27
    %p38 = scmp.eq.s32.totalorder %s18, 0
    %p39 = por %p37, %p38
    %p40 = scmp.ne.s32.totalorder %s26, %s27
    %p41 = scmp.eq.s32.totalorder %s19, 1
    %p42 = por %p40, %p41
    %p44 = scmp.ne.s32.totalorder %s27, %s43
    %p45 = scmp.eq.s32.totalorder %s19, 0
    %p46 = por %p44, %p45
    %s47 = ssub.s32 %s13, %s20
    %p48 = scmp.eq.s32.totalorder %s47, 0
    %s50 = sadd.s32 %s49, 1
    %s51 = scalar_select %p48, %s49, %s50
    %p54 = pneg %p48
    %p55 = scmp.eq.s32.totalorder %s13, 1
    %p56 = por %p54, %p55
    %p57 = scmp.ne.s32.totalorder %s49, %s52
    %p58 = scmp.eq.s32.totalorder %s13, 0
    %p59 = por %p57, %p58
    %p60 = scmp.ne.s32.totalorder %s49, %s52
    %p61 = scmp.eq.s32.totalorder %s18, 1
    %p62 = por %p60, %p61
    %p63 = scmp.ne.s32.totalorder %s52, %s53
    %p64 = scmp.eq.s32.totalorder %s18, 0
    %p65 = por %p63, %p64
    %p66 = scmp.ne.s32.totalorder %s52, %s53
    %p67 = scmp.eq.s32.totalorder %s19, 1
    %p68 = por %p66, %p67
    %p70 = scmp.ne.s32.totalorder %s53, %s69
    %p71 = scmp.eq.s32.totalorder %s19, 0
    %p72 = por %p70, %p71
    %s74 = sadd.s32 %s73, 1
    %p77 = scmp.eq.s32.totalorder %s13, 1
    %p78 = scmp.ne.s32.totalorder %s73, %s75
    %p79 = scmp.eq.s32.totalorder %s13, 0
    %p80 = por %p78, %p79
    %p81 = scmp.ne.s32.totalorder %s73, %s75
    %p82 = scmp.eq.s32.totalorder %s18, 1
    %p83 = por %p81, %p82
    %p84 = scmp.ne.s32.totalorder %s75, %s76
    %p85 = scmp.eq.s32.totalorder %s18, 0
    %p86 = por %p84, %p85
    %p87 = scmp.ne.s32.totalorder %s75, %s76
    %p88 = scmp.eq.s32.totalorder %s19, 1
    %p89 = por %p87, %p88
    %p91 = scmp.ne.s32.totalorder %s76, %s90
    %p92 = scmp.eq.s32.totalorder %s19, 0
    %p93 = por %p91, %p92
    %s95 = sadd.s32 %s94, 1
    %p98 = scmp.eq.s32.totalorder %s13, 1
    %p99 = scmp.ne.s32.totalorder %s94, %s96
    %p100 = scmp.eq.s32.totalorder %s13, 0
    %p101 = por %p99, %p100
    %p102 = scmp.ne.s32.totalorder %s94, %s96
    %p103 = scmp.eq.s32.totalorder %s18, 1
    %p104 = por %p102, %p103
    %p105 = scmp.ne.s32.totalorder %s96, %s97
    %p106 = scmp.eq.s32.totalorder %s18, 0
    %p107 = por %p105, %p106
    %p108 = scmp.ne.s32.totalorder %s96, %s97
    %p109 = scmp.eq.s32.totalorder %s19, 1
    %p110 = por %p108, %p109
    %p112 = scmp.ne.s32.totalorder %s97, %s111
    %p113 = scmp.eq.s32.totalorder %s19, 0
    %p114 = por %p112, %p113
    %s116 = sadd.s32 %s115, 1
    %p119 = scmp.eq.s32.totalorder %s13, 1
    %p120 = scmp.ne.s32.totalorder %s115, %s117
    %p121 = scmp.eq.s32.totalorder %s13, 0
    %p122 = por %p120, %p121
    %p123 = scmp.ne.s32.totalorder %s115, %s117
    %p124 = scmp.eq.s32.totalorder %s18, 1
    %p125 = por %p123, %p124
    %p126 = scmp.ne.s32.totalorder %s117, %s118
    %p127 = scmp.eq.s32.totalorder %s18, 0
    %p128 = por %p126, %p127
    %p129 = scmp.ne.s32.totalorder %s117, %s118
    %p130 = scmp.eq.s32.totalorder %s19, 1
    %p131 = por %p129, %p130
    %p133 = scmp.ne.s32.totalorder %s118, %s132
    %p134 = scmp.eq.s32.totalorder %s19, 0
    %p135 = por %p133, %p134
    %s137 = sadd.s32 %s136, 1
    %p140 = scmp.eq.s32.totalorder %s13, 1
    %p141 = scmp.ne.s32.totalorder %s136, %s138
    %p142 = scmp.eq.s32.totalorder %s13, 0
    %p143 = por %p141, %p142
    %p144 = scmp.ne.s32.totalorder %s136, %s138
    %p145 = scmp.eq.s32.totalorder %s18, 1
    %p146 = por %p144, %p145
    %p147 = scmp.ne.s32.totalorder %s138, %s139
    %p148 = scmp.eq.s32.totalorder %s18, 0
    %p149 = por %p147, %p148
    %p150 = scmp.ne.s32.totalorder %s138, %s139
    %p151 = scmp.eq.s32.totalorder %s19, 1
    %p152 = por %p150, %p151
    %p154 = scmp.ne.s32.totalorder %s139, %s153
    %p155 = scmp.eq.s32.totalorder %s19, 0
    %p156 = por %p154, %p155
    %s157 = ssub.s32 %s13, %s20
    %p158 = scmp.eq.s32.totalorder %s157, 0
    %s160 = sadd.s32 %s159, 1
    %s161 = scalar_select %p158, %s159, %s160
    %p164 = pneg %p158
    %p165 = scmp.eq.s32.totalorder %s13, 1
    %p166 = por %p164, %p165
    %p167 = scmp.ne.s32.totalorder %s159, %s162
    %p168 = scmp.eq.s32.totalorder %s13, 0
    %p169 = por %p167, %p168
    %p170 = scmp.ne.s32.totalorder %s159, %s162
    %p171 = scmp.eq.s32.totalorder %s18, 1
    %p172 = por %p170, %p171
    %p173 = scmp.ne.s32.totalorder %s162, %s163
    %p174 = scmp.eq.s32.totalorder %s18, 0
    %p175 = por %p173, %p174
    %p176 = scmp.ne.s32.totalorder %s162, %s163
    %p177 = scmp.eq.s32.totalorder %s19, 1
    %p178 = por %p176, %p177
    %p180 = scmp.ne.s32.totalorder %s163, %s179
    %p181 = scmp.eq.s32.totalorder %s19, 0
    %p182 = por %p180, %p181
    %p183 = scmp.le.s32.totalorder 1, %s13
    %p184 = scmp.lt.s32.totalorder %s13, 3
    %p185 = pnand %p183, %p184
    %p186 = pneg %p185
    // Predicated region
    $region9: #{discriminator_forward.1} parent=5 // pred_check
      _
    $region10: #{discriminator_forward.1} parent=5 // pred_check_branch
      %188 = sbr.rel (%p185) target = $region12
    $region11: #{discriminator_forward.1} parent=5 // pred_region
      %s189 = ssub.s32 %s13, 1
      // Predicated region
      $region13: #{discriminator_forward.1} parent=11 // pred_check
        %p190 = pneg %p86
      $region14: #{discriminator_forward.1} parent=11 // pred_check_branch
        %192 = sbr.rel (%p190) target = $region16
      $region15: #{discriminator_forward.1} parent=11 // pred_region
        _
      $region16: #{discriminator_forward.1} parent=11 // pred_fallthru
        _
      // Predicated region
      $region17: #{discriminator_forward.1} parent=11 // pred_check
        %p193 = pneg %p107
      $region18: #{discriminator_forward.1} parent=11 // pred_check_branch
        %195 = sbr.rel (%p193) target = $region20
      $region19: #{discriminator_forward.1} parent=11 // pred_region
        _
      $region20: #{discriminator_forward.1} parent=11 // pred_fallthru
        _
      // Predicated region
      $region21: #{discriminator_forward.1} parent=11 // pred_check
        %p196 = pneg %p128
      $region22: #{discriminator_forward.1} parent=11 // pred_check_branch
        %198 = sbr.rel (%p196) target = $region24
      $region23: #{discriminator_forward.1} parent=11 // pred_region
        _
      $region24: #{discriminator_forward.1} parent=11 // pred_fallthru
        _
      // Predicated region
      $region25: #{discriminator_forward.1} parent=11 // pred_check
        %p199 = pneg %p149
      $region26: #{discriminator_forward.1} parent=11 // pred_check_branch
        %201 = sbr.rel (%p199) target = $region28
      $region27: #{discriminator_forward.1} parent=11 // pred_region
        _
      $region28: #{discriminator_forward.1} parent=11 // pred_fallthru
        _
    $region12: #{discriminator_forward.1} parent=5 // pred_fallthru
      _
    %p202 = scmp.lt.s32.totalorder %s13, 2
    // Predicated region
    $region29: #{discriminator_forward.1} parent=5 // pred_check
      %p203 = pneg %p202
    $region30: #{discriminator_forward.1} parent=5 // pred_check_branch
      %205 = sbr.rel (%p203) target = $region32
    $region31: #{discriminator_forward.1} parent=5 // pred_region
      // Predicated region
      $region33: #{discriminator_forward.1} parent=31 // pred_check
        %p206 = pneg %p33
      $region34: #{discriminator_forward.1} parent=31 // pred_check_branch
        %208 = sbr.rel (%p206) target = $region36
      $region35: #{discriminator_forward.1} parent=31 // pred_region
        %p209 = scmp.lt.s32.totalorder %s13, 1
        %s210 = scalar_select %p209, %s13, 1
        %s211 = smul.addr %s210, 16
        %s212 = smul.addr %s211, 4
        %s213 = scalar_lea.vmem %s0, %s212
      $region36: #{discriminator_forward.1} parent=31 // pred_fallthru
        _
      // Predicated region
      $region37: #{discriminator_forward.1} parent=31 // pred_check
        %p214 = pneg %p59
      $region38: #{discriminator_forward.1} parent=31 // pred_check_branch
        %216 = sbr.rel (%p214) target = $region40
      $region39: #{discriminator_forward.1} parent=31 // pred_region
        %p217 = scmp.lt.s32.totalorder %s13, 1
        %s218 = scalar_select %p217, %s13, 1
        %s219 = smul.addr %s218, 4
        %s220 = smul.addr %s219, 4
        %s221 = scalar_lea.vmem %s1, %s220
      $region40: #{discriminator_forward.1} parent=31 // pred_fallthru
        _
    $region32: #{discriminator_forward.1} parent=5 // pred_fallthru
      _
    %p222 = scmp.le.s32.totalorder 1, %s13
    %p223 = scmp.lt.s32.totalorder %s13, 3
    %p224 = pnand %p222, %p223
    %p225 = pneg %p224
    // Predicated region
    $region41: #{discriminator_forward.1} parent=5 // pred_check
      _
    $region42: #{discriminator_forward.1} parent=5 // pred_check_branch
      %227 = sbr.rel (%p224) target = $region44
    $region43: #{discriminator_forward.1} parent=5 // pred_region
      %s228 = ssub.s32 %s13, 1
      %p229 = scmp.lt.s32.totalorder %s18, 1
      %s230 = scalar_select %p229, %s18, 1
      %s231 = smul.addr %s230, 16
      %s232 = smul.addr %s231, 4
      %s233 = scalar_lea.vmem %s0, %s232
      %p234 = pneg %p39
      %p235 = pneg %p36
      %p236 = scmp.lt.s32.totalorder %s18, 1
      %s237 = scalar_select %p236, %s18, 1
      %s238 = smul.addr %s237, 4
      %s239 = smul.addr %s238, 4
      %s240 = scalar_lea.vmem %s1, %s239
      %p241 = pneg %p65
      %p242 = pneg %p62
      %p243 = pneg %p86
      %p244 = pneg %p83
      %p245 = pneg %p107
      %p246 = pneg %p104
      %p247 = pneg %p128
      %p248 = pneg %p125
      %p249 = pneg %p149
      %p250 = pneg %p146
      %p251 = pneg %p175
      %p252 = pneg %p172
      %p253 = scmp.lt.s32.totalorder %s18, 1
      %s254 = scalar_select %p253, %s18, 1
      %s255 = scalar_lea.vmem %s6, %s254
      %p256 = scmp.lt.s32.totalorder %s18, 1
      %s257 = scalar_select %p256, %s18, 1
      %s258 = smul.addr %s257, 16
      %s259 = smul.addr %s258, 4
      %s260 = scalar_lea.vmem %s0, %s259
      %p261 = scmp.lt.s32.totalorder %s18, 1
      %s262 = scalar_select %p261, %s18, 1
      %s263 = smul.addr %s262, 4
      %s264 = smul.addr %s263, 4
      %s265 = scalar_lea.vmem %s1, %s264
      %p266 = scmp.lt.s32.totalorder %s18, 1
      %s267 = scalar_select %p266, %s18, 1
      %s268 = scalar_lea.vmem %s6, %s267
      %v270 = vld [vmem:[%s260] sm:$0xf]
      %v271 = vld [vmem:[%s260 + $0x4] sm:$0xf]
      %v272 = vld [vmem:[%s260 + $0x8] sm:$0xf]
      %v273 = vld [vmem:[%s260 + $0xc] sm:$0xf]
      %v274 = vld [vmem:[%s260 + $0x10] sm:$0xf]
      %v275 = vld [vmem:[%s260 + $0x14] sm:$0xf]
      %v276 = vld [vmem:[%s260 + $0x18] sm:$0xf]
      %v277 = vld [vmem:[%s260 + $0x1c] sm:$0xf]
      %v278 = vld [vmem:[%s260 + $0x20] sm:$0xf]
      %v279 = vld [vmem:[%s260 + $0x24] sm:$0xf]
      %v280 = vld [vmem:[%s260 + $0x28] sm:$0xf]
      %v281 = vld [vmem:[%s260 + $0x2c] sm:$0xf]
      %v282 = vld [vmem:[%s260 + $0x30] sm:$0xf]
      %v283 = vld [vmem:[%s260 + $0x34] sm:$0xf]
      %v284 = vld [vmem:[%s260 + $0x38] sm:$0xf]
      %v285 = vld [vmem:[%s260 + $0x3c] sm:$0xf]
      %v286 = vld [vmem:[%s265] sm:$0xf]
      %v287 = vld [vmem:[%s265 + $0x4] sm:$0xf]
      %v288 = vld [vmem:[%s265 + $0x8] sm:$0xf]
      %v289 = vld [vmem:[%s265 + $0xc] sm:$0xf]
      %v290 = vld [vmem:[%s2] sm:$0xf]
      %v291 = vld [vmem:[%s2 + $0x4] sm:$0xf]
      %v292 = vld [vmem:[%s2 + $0x8] sm:$0xf]
      %v293 = vld [vmem:[%s2 + $0xc] sm:$0xf]
      %v298 = vunpack.c.l.b16 %v290
      %v299 = vunpack.c.l.b16 %v291
      %v300 = vunpack.c.l.b16 %v292
      %v301 = vunpack.c.l.b16 %v293
      %v302 = vpack.c.b16 %v299, %v298
      %v303 = vpack.c.b16 %v301, %v300
      %v308 = vunpack.c.l.b16 %v286
      %v309 = vunpack.c.l.b16 %v287
      %v310 = vunpack.c.l.b16 %v288
      %v311 = vunpack.c.l.b16 %v289
      %v312 = vpack.c.b16 %v309, %v308
      %v313 = vpack.c.b16 %v311, %v310
      %vm316 = vcmask 261120
      %v318 = vsel %vm316, %v302, 0
      %v321 = vsel %vm316, %v303, 0
      %323 = vmatprep.subr.bf16.mxu0 0
      %324 = vmatpush1.bf16.msra.mxu0 %v312
      %325 = vmatprep.subr.bf16.mxu0 0
      %326 = vmatpush1.bf16.msra.mxu0 %v313
      %327 = vmatprep.subr.bf16.mxu0 0
      %328 = vmatpush1.bf16.msra.mxu0 0
      %329 = vmatprep.subr.bf16.mxu0 0
      %330 = vmatpush1.bf16.msra.mxu0 0
      %331 = vmatprep.subr.bf16.mxu0 0
      %332 = vmatpush1.bf16.msra.mxu0 0
      %333 = vmatprep.subr.bf16.mxu0 0
      %334 = vmatpush1.bf16.msra.mxu0 0
      %335 = vmatprep.subr.bf16.mxu0 0
      %336 = vmatpush1.bf16.msra.mxu0 0
      %337 = vmatprep.subr.bf16.mxu0 0
      %338 = vmatpush1.bf16.msra.mxu0 0
      %339 = vmatprep.subr.bf16.mxu0 0
      %340 = vmatpush1.bf16.msra.mxu0 0
      %341 = vmatprep.subr.bf16.mxu0 0
      %342 = vmatpush1.bf16.msra.mxu0 0
      %343 = vmatprep.subr.bf16.mxu0 0
      %344 = vmatpush1.bf16.msra.mxu0 0
      %345 = vmatprep.subr.bf16.mxu0 0
      %346 = vmatpush1.bf16.msra.mxu0 0
      %347 = vmatprep.subr.bf16.mxu0 0
      %348 = vmatpush1.bf16.msra.mxu0 0
      %349 = vmatprep.subr.bf16.mxu0 0
      %350 = vmatpush1.bf16.msra.mxu0 0
      %351 = vmatprep.subr.bf16.mxu0 0
      %352 = vmatpush1.bf16.msra.mxu0 0
      %353 = vmatprep.subr.bf16.mxu0 0
      %354 = vmatpush1.bf16.msra.mxu0 0
      %355 = vmatprep.mubr.bf16.mxu0 0
      %356 = vmatmul.mubr.bf16.gmra.mrb[0].mxu0 %v318
      %v357 = vpop.f32.mrb[0].mxu0
      %v358 = vadd.f32 0.0, %v357
      %v359 = vpop.f32.mrb[0].mxu0
      %v360 = vpop.f32.mrb[0].mxu0
      %v361 = vadd.f32 0.0, %v360
      %v362 = vpop.f32.mrb[0].mxu0
      %363 = vmatprep.mubr.bf16.mxu0 0
      %364 = vmatmul.mubr.bf16.gmra.mrb[0].mxu0 %v321
      %v365 = vpop.f32.mrb[0].mxu0
      %v366 = vadd.f32 0.0, %v365
      %v367 = vpop.f32.mrb[0].mxu0
      %v368 = vpop.f32.mrb[0].mxu0
      %v369 = vadd.f32 0.0, %v368
      %v370 = vpop.f32.mrb[0].mxu0
      %371 = vdwg.mxu0
      %v372 = vpack.c.bf16 %v361, %v358
      %v373 = vpack.c.bf16 %v369, %v366
      %v374 = vld [vmem:[%s3] sm:$0xff]
      %v375 = vld [vmem:[%s3 + $0x8] sm:$0xff]
      %v376 = vld [vmem:[%s3 + $0x10] sm:$0xff]
      %v377 = vld [vmem:[%s3 + $0x18] sm:$0xff]
      %379 = vset.pattern.permute.xlu0 0
      %380 = vperm.xlu0 %379, %v374
      %v381 = vpop.permute.xlu0 %380
      %384 = vset.pattern.permute.xlu0 0
      %385 = vperm.xlu0 %384, %v375
      %v386 = vpop.permute.xlu0 %385
      %389 = vset.pattern.permute.xlu0 0
      %390 = vperm.xlu0 %389, %v376
      %v391 = vpop.permute.xlu0 %390
      %394 = vset.pattern.permute.xlu0 0
      %395 = vperm.xlu0 %394, %v377
      %v396 = vpop.permute.xlu0 %395
      %v414 = vunpack.c.l.b16 %v270
      %v415 = vunpack.c.l.b16 %v271
      %v416 = vunpack.c.l.b16 %v272
      %v417 = vunpack.c.l.b16 %v273
      %v418 = vunpack.c.l.b16 %v274
      %v419 = vunpack.c.l.b16 %v275
      %v420 = vunpack.c.l.b16 %v276
      %v421 = vunpack.c.l.b16 %v277
      %v422 = vunpack.c.l.b16 %v278
      %v423 = vunpack.c.l.b16 %v279
      %v424 = vunpack.c.l.b16 %v280
      %v425 = vunpack.c.l.b16 %v281
      %v426 = vunpack.c.l.b16 %v282
      %v427 = vunpack.c.l.b16 %v283
      %v428 = vunpack.c.l.b16 %v284
      %v429 = vunpack.c.l.b16 %v285
      %v430 = vpack.c.b16 %v415, %v414
      %v431 = vpack.c.b16 %v417, %v416
      %v432 = vpack.c.b16 %v419, %v418
      %v433 = vpack.c.b16 %v421, %v420
      %v434 = vpack.c.b16 %v423, %v422
      %v435 = vpack.c.b16 %v425, %v424
      %v436 = vpack.c.b16 %v427, %v426
      %v437 = vpack.c.b16 %v429, %v428
      %446 = vmatprep.subr.bf16.mxu0 0
      %447 = vmatpush1.bf16.msra.mxu0 %v430
      %448 = vmatprep.subr.bf16.mxu0 0
      %449 = vmatpush1.bf16.msra.mxu0 %v431
      %450 = vmatprep.subr.bf16.mxu0 0
      %451 = vmatpush1.bf16.msra.mxu0 %v432
      %452 = vmatprep.subr.bf16.mxu0 0
      %453 = vmatpush1.bf16.msra.mxu0 %v433
      %454 = vmatprep.subr.bf16.mxu0 0
      %455 = vmatpush1.bf16.msra.mxu0 %v434
      %456 = vmatprep.subr.bf16.mxu0 0
      %457 = vmatpush1.bf16.msra.mxu0 %v435
      %458 = vmatprep.subr.bf16.mxu0 0
      %459 = vmatpush1.bf16.msra.mxu0 %v436
      %460 = vmatprep.subr.bf16.mxu0 0
      %461 = vmatpush1.bf16.msra.mxu0 %v437
      %462 = vmatprep.subr.bf16.mxu0 0
      %463 = vmatpush1.bf16.msra.mxu0 0
      %464 = vmatprep.subr.bf16.mxu0 0
      %465 = vmatpush1.bf16.msra.mxu0 0
      %466 = vmatprep.subr.bf16.mxu0 0
      %467 = vmatpush1.bf16.msra.mxu0 0
      %468 = vmatprep.subr.bf16.mxu0 0
      %469 = vmatpush1.bf16.msra.mxu0 0
      %470 = vmatprep.subr.bf16.mxu0 0
      %471 = vmatpush1.bf16.msra.mxu0 0
      %472 = vmatprep.subr.bf16.mxu0 0
      %473 = vmatpush1.bf16.msra.mxu0 0
      %474 = vmatprep.subr.bf16.mxu0 0
      %475 = vmatpush1.bf16.msra.mxu0 0
      %476 = vmatprep.subr.bf16.mxu0 0
      %477 = vmatpush1.bf16.msra.mxu0 0
      %478 = vmatprep.mubr.bf16.mxu0 0
      %479 = vmatmul.mubr.bf16.gmra.mrb[0].mxu0 %v372
      %v480 = vpop.f32.mrb[0].mxu0
      %v481 = vadd.f32 %v381, %v480
      %v482 = vpop.f32.mrb[0].mxu0
      %v483 = vpop.f32.mrb[0].mxu0
      %v484 = vadd.f32 %v386, %v483
      %v485 = vpop.f32.mrb[0].mxu0
      %486 = vmatprep.mubr.bf16.mxu0 0
      %487 = vmatmul.mubr.bf16.gmra.mrb[0].mxu0 %v373
      %v488 = vpop.f32.mrb[0].mxu0
      %v489 = vadd.f32 %v391, %v488
      %v490 = vpop.f32.mrb[0].mxu0
      %v491 = vpop.f32.mrb[0].mxu0
      %v492 = vadd.f32 %v396, %v491
      %v493 = vpop.f32.mrb[0].mxu0
      %494 = vdwg.mxu0
      %v495 = vxor.u32 %v481, 2147483648
      %v496 = vxor.u32 %v484, 2147483648
      %v497 = vxor.u32 %v489, 2147483648
      %v498 = vxor.u32 %v492, 2147483648
      %v499 = vmul.f32 %v495, 1.442695
      %v500 = vpow.pop %v499
      %v501 = vmul.f32 %v496, 1.442695
      %v502 = vpow.pop %v501
      %v503 = vmul.f32 %v497, 1.442695
      %v504 = vpow.pop %v503
      %v505 = vmul.f32 %v498, 1.442695
      %v506 = vpow.pop %v505
      %v507 = vadd.f32 %v500, 1.0
      %v508 = vadd.f32 %v502, 1.0
      %v509 = vadd.f32 %v504, 1.0
      %v510 = vadd.f32 %v506, 1.0
      %v511 = vrcp.pop %v507
      %v512 = vmul.f32 1.0, %v511
      %v513 = vrcp.pop %v508
      %v514 = vmul.f32 1.0, %v513
      %v515 = vrcp.pop %v509
      %v516 = vmul.f32 1.0, %v515
      %v517 = vrcp.pop %v510
      %v518 = vmul.f32 1.0, %v517
      %v519 = vpack.c.bf16 %v514, %v512
      %v520 = vpack.c.bf16 %v518, %v516
      %521 = vmatprep.subr.bf16.mxu0 0
      %522 = vmatpush1.bf16.msra.mxu0 %v430
      %523 = vmatprep.subr.bf16.mxu0 0
      %524 = vmatpush1.bf16.msra.mxu0 %v431
      %525 = vmatprep.subr.bf16.mxu0 0
      %526 = vmatpush1.bf16.msra.mxu0 %v432
      %527 = vmatprep.subr.bf16.mxu0 0
      %528 = vmatpush1.bf16.msra.mxu0 %v433
      %529 = vmatprep.subr.bf16.mxu0 0
      %530 = vmatpush1.bf16.msra.mxu0 %v434
      %531 = vmatprep.subr.bf16.mxu0 0
      %532 = vmatpush1.bf16.msra.mxu0 %v435
      %533 = vmatprep.subr.bf16.mxu0 0
      %534 = vmatpush1.bf16.msra.mxu0 %v436
      %535 = vmatprep.subr.bf16.mxu0 0
      %536 = vmatpush1.bf16.msra.mxu0 %v437
      %537 = vmatprep.subr.bf16.mxu0 0
      %538 = vmatpush1.bf16.msra.mxu0 0
      %539 = vmatprep.subr.bf16.mxu0 0
      %540 = vmatpush1.bf16.msra.mxu0 0
      %541 = vmatprep.subr.bf16.mxu0 0
      %542 = vmatpush1.bf16.msra.mxu0 0
      %543 = vmatprep.subr.bf16.mxu0 0
      %544 = vmatpush1.bf16.msra.mxu0 0
      %545 = vmatprep.subr.bf16.mxu0 0
      %546 = vmatpush1.bf16.msra.mxu0 0
      %547 = vmatprep.subr.bf16.mxu0 0
      %548 = vmatpush1.bf16.msra.mxu0 0
      %549 = vmatprep.subr.bf16.mxu0 0
      %550 = vmatpush1.bf16.msra.mxu0 0
      %551 = vmatprep.subr.bf16.mxu0 0
      %552 = vmatpush1.bf16.msra.mxu0 0
      %553 = vmatprep.mubr.bf16.mxu0 0
      %554 = vmatmul.mubr.bf16.gmra.mrb[0].mxu0 %v519
      %v555 = vpop.f32.mrb[0].mxu0
      %v556 = vadd.f32 0.0, %v555
      %v557 = vpop.f32.mrb[0].mxu0
      %v558 = vpop.f32.mrb[0].mxu0
      %v559 = vadd.f32 0.0, %v558
      %v560 = vpop.f32.mrb[0].mxu0
      %561 = vmatprep.mubr.bf16.mxu0 0
      %562 = vmatmul.mubr.bf16.gmra.mrb[0].mxu0 %v520
      %v563 = vpop.f32.mrb[0].mxu0
      %v564 = vadd.f32 0.0, %v563
      %v565 = vpop.f32.mrb[0].mxu0
      %v566 = vpop.f32.mrb[0].mxu0
      %v567 = vadd.f32 0.0, %v566
      %v568 = vpop.f32.mrb[0].mxu0
      %569 = vdwg.mxu0
      %v570 = vld [vmem:[%s4] sm:$0xff]
      %v571 = vld [vmem:[%s4 + $0x8] sm:$0xff]
      %v572 = vld [vmem:[%s4 + $0x10] sm:$0xff]
      %v573 = vld [vmem:[%s4 + $0x18] sm:$0xff]
      %575 = vset.pattern.permute.xlu0 0
      %576 = vperm.xlu0 %575, %v570
      %v577 = vpop.permute.xlu0 %576
      %580 = vset.pattern.permute.xlu0 0
      %581 = vperm.xlu0 %580, %v571
      %v582 = vpop.permute.xlu0 %581
      %585 = vset.pattern.permute.xlu0 0
      %586 = vperm.xlu0 %585, %v572
      %v587 = vpop.permute.xlu0 %586
      %590 = vset.pattern.permute.xlu0 0
      %591 = vperm.xlu0 %590, %v573
      %v592 = vpop.permute.xlu0 %591
      %v594 = vmul.f32 %v556, %v577
      %v595 = vmul.f32 %v559, %v582
      %v596 = vmul.f32 %v564, %v587
      %v597 = vmul.f32 %v567, %v592
      %v598 = vadd.f32 %v594, %v595
      %v599 = vadd.f32 %v598, %v596
      %v600 = vadd.f32 %v599, %v597
      %v601 = vrot.slane %v600, 4
      %v602 = vadd.f32 %v600, %v601
      %v603 = vrot.slane %v602, 2
      %v604 = vadd.f32 %v602, %v603
      %v605 = vrot.slane %v604, 1
      %v606 = vadd.f32 %v604, %v605
      %s607 = sld [smem:[#allocation2]]
      %v608 = vstv %s607
      %v609 = vadd.f32 %v606, %v608
      %v610 = vxor.u32 %v609, 2147483648
      %v611 = vmul.f32 %v610, 1.442695
      %v612 = vpow.pop %v611
      %v613 = vadd.f32 %v612, 1.0
      %v614 = vrcp.pop %v613
      %v615 = vmul.f32 1.0, %v614
      %616 = vst [vmem:[%s268] sm:$0x1] %v615
      %p617 = scmp.lt.s32.totalorder %s18, 1
      %s618 = scalar_select %p617, %s18, 1
      %s619 = scalar_lea.vmem %s6, %s618
      // Predicated region
      $region45: #{discriminator_forward.1} parent=43 // pred_check
        %p620 = pneg %p172
      $region46: #{discriminator_forward.1} parent=43 // pred_check_branch
        %622 = sbr.rel (%p620) target = $region48
      $region47: #{discriminator_forward.1} parent=43 // pred_region
        _
      $region48: #{discriminator_forward.1} parent=43 // pred_fallthru
        _
    $region44: #{discriminator_forward.1} parent=5 // pred_fallthru
      _
    %p623 = scmp.le.s32.totalorder 2, %s13
    // Predicated region
    $region49: #{discriminator_forward.1} parent=5 // pred_check
      %p624 = pneg %p623
    $region50: #{discriminator_forward.1} parent=5 // pred_check_branch
      %626 = sbr.rel (%p624) target = $region52
    $region51: #{discriminator_forward.1} parent=5 // pred_region
      %s627 = ssub.s32 %s13, 2
      // Predicated region
      $region53: #{discriminator_forward.1} parent=51 // pred_check
        %p628 = pneg %p178
      $region54: #{discriminator_forward.1} parent=51 // pred_check_branch
        %630 = sbr.rel (%p628) target = $region56
      $region55: #{discriminator_forward.1} parent=51 // pred_region
        %p631 = scmp.lt.s32.totalorder %s19, 1
        %s632 = scalar_select %p631, %s19, 1
        %s633 = scalar_lea.vmem %s6, %s632
      $region56: #{discriminator_forward.1} parent=51 // pred_fallthru
        _
    $region52: #{discriminator_forward.1} parent=5 // pred_fallthru
      _
  $region6: #{discriminator_forward.1} parent=0 // loop_footer
    %s17 = sadd.s32 1, %s13
  $region7: #{discriminator_forward.1} parent=0 // loop_footer_branch
    %12 = sbr.rel target = $region3
  $region8: #{discriminator_forward.1} parent=0 // loop_exit
    _

</llo_original>
